<compile_context>
chip_gen: v6e
topology: v6e:2x2x1
jax: 0.10.0
libtpu: 0.0.40
codegen_flags: <defaults>
</compile_context>

<pallas_src>
import jax
import jax.numpy as jnp
from jax import lax
from jax.experimental import pallas as pl
from jax.experimental.pallas import tpu as pltpu

_LANE = 128
_SUBLANE = 8


def _round_up(v, m):
    return ((v + m - 1) // m) * m


# ---------------------------------------------------------------------------
# Kernel 1: one GraphConv('mean') layer + ReLU
# ---------------------------------------------------------------------------
def _graph_conv_kernel(ahat_ref, xk_ref, xi_ref, w_ref, b_ref, out_ref, acc_ref):
    k = pl.program_id(1)              # contraction tile (arbitrary / reduction)
    tm = acc_ref.shape[0]
    f_pad = xk_ref.shape[1]

    @pl.when(k == 0)
    def _():
        # Zero the aggregation half and stage this row-tile's root features in
        # the other half: the epilogue then needs no concatenate / extra copy.
        acc_ref[:, :f_pad] = jnp.zeros((tm, f_pad), jnp.float32)
        acc_ref[:, f_pad:] = xi_ref[...].astype(jnp.float32)

    # Mean aggregation: stream one (tm, tk) bf16 tile of Ahat against the
    # BlockSpec-prefetched (tk, f_pad) node-feature slice; accumulate in f32.
    acc_ref[:, :f_pad] += jnp.dot(ahat_ref[...], xk_ref[...],
                                  preferred_element_type=jnp.float32)

    @pl.when(k == pl.num_programs(1) - 1)
    def _():
        # Fused weight matmul: [agg | x_root] @ [w_rel ; w_root] as one native
        # bf16 MXU pass (f32 accumulation), + bias, + ReLU, lane-dense store.
        z = acc_ref[...].astype(jnp.bfloat16)
        h = jnp.dot(z, w_ref[...], preferred_element_type=jnp.float32) + b_ref[...]
        out_ref[...] = jnp.maximum(h, 0.0).astype(out_ref.dtype)
        # NOTE: padded rows (>= N) hold relu(bias) garbage; harmless because
        # Ahat's and pool_mat's padded columns are zero, so no real row or
        # graph readout ever consumes them.


def _conv_vmem_bytes(tm, tk, f_pad, h_pad):
    bf16, f32 = 2, 4
    return (2 * tm * tk * bf16              # Ahat tiles (double buffered, streamed)
            + 2 * tk * f_pad * bf16         # x aggregation slices (double buffered)
            + 2 * tm * f_pad * bf16         # x root slices (double buffered)
            + 2 * 2 * f_pad * h_pad * bf16  # fused bf16 weights (double buffered)
            + 2 * h_pad * f32               # bias
            + 2 * tm * h_pad * bf16         # output tiles (double buffered)
            + tm * 2 * f_pad * f32)         # f32 accumulator scratch


def _vmem_limit(need_bytes):
    # Derived budget + headroom (instead of a blanket 48 MiB) so v7x's
    # 64 MiB/TC is respected and large configs fail loudly at the source.
    return max(int(need_bytes * 1.5) + (2 << 20), 16 << 20)


def _graph_conv_layer(ahat_p, x_p, w_cat, b_pad, *, tm, tk, out_dtype):
    n_pad, f_pad = x_p.shape
    h_pad = w_cat.shape[1]
    vmem = _vmem_limit(_conv_vmem_bytes(tm, tk, f_pad, h_pad))
    return pl.pallas_call(
        _graph_conv_kernel,
        out_shape=jax.ShapeDtypeStruct((n_pad, h_pad), out_dtype),
        grid_spec=pltpu.PrefetchScalarGridSpec(
            num_scalar_prefetch=0,
            grid=(n_pad // tm, n_pad // tk),
            in_specs=[
                pl.BlockSpec((tm, tk), lambda i, k: (i, k)),      # Ahat (streamed, dominant bytes)
                pl.BlockSpec((tk, f_pad), lambda i, k: (k, 0)),   # x slice for aggregation
                pl.BlockSpec((tm, f_pad), lambda i, k: (i, 0)),   # x slice for root term
                pl.BlockSpec((2 * f_pad, h_pad), lambda i, k: (0, 0)),  # fused bf16 weights
                pl.BlockSpec((1, h_pad), lambda i, k: (0, 0)),          # f32 bias
            ],
            out_specs=pl.BlockSpec((tm, h_pad), lambda i, k: (i, 0)),
            scratch_shapes=[pltpu.VMEM((tm, 2 * f_pad), jnp.float32)],
        ),
        compiler_params=pltpu.CompilerParams(
            dimension_semantics=("parallel", "arbitrary"),
            vmem_limit_bytes=vmem,
        ),
    )(ahat_p, x_p, x_p, w_cat, b_pad)


# ---------------------------------------------------------------------------
# Kernel 2: global_mean_pool as a tiled matmul  (pool [G, N] @ x [N, H])
# ---------------------------------------------------------------------------
def _readout_kernel(pool_ref, x_ref, out_ref):
    k = pl.program_id(0)
    part = jnp.dot(pool_ref[...], x_ref[...], preferred_element_type=jnp.float32)

    @pl.when(k == 0)
    def _():
        out_ref[...] = part

    @pl.when(k > 0)
    def _():
        out_ref[...] += part


def _global_mean_pool(pool_p, x_p, *, tk):
    g_pad, n_pad = pool_p.shape
    h_pad = x_p.shape[1]
    need = 2 * g_pad * tk * 2 + 2 * tk * h_pad * 2 + g_pad * h_pad * 4
    return pl.pallas_call(
        _readout_kernel,
        out_shape=jax.ShapeDtypeStruct((g_pad, h_pad), jnp.float32),
        grid_spec=pltpu.PrefetchScalarGridSpec(
            num_scalar_prefetch=0,
            grid=(n_pad // tk,),
            in_specs=[
                pl.BlockSpec((g_pad, tk), lambda k: (0, k)),
                pl.BlockSpec((tk, h_pad), lambda k: (k, 0)),
            ],
            out_specs=pl.BlockSpec((g_pad, h_pad), lambda k: (0, 0)),
        ),
        compiler_params=pltpu.CompilerParams(
            dimension_semantics=("arbitrary",),
            vmem_limit_bytes=_vmem_limit(need),
        ),
    )(pool_p, x_p)


# ---------------------------------------------------------------------------
# Wrapper: padding / quantization glue + layer loop
# ---------------------------------------------------------------------------
def graph_feature_extract(ahat, pool_mat, x, params, *, max_tile=1024,
                          stream_dtype=jnp.bfloat16):
    """params: list of (w_rel [in,out], w_root [in,out], b [1,out]) per layer.

    ahat:     [N, N] dense mean-normalized adjacency (Ahat[i,j] = 1/deg_in(i) per edge j->i)
    pool_mat: [G, N] mean-pooling matrix (1/|graph g| for members of g)
    x:        [N, F] node features
    """
    n, f0 = x.shape
    g = pool_mat.shape[0]
    h_final = params[-1][0].shape[1]

    tile = min(max_tile, _round_up(n, _LANE))
    n_pad = _round_up(n, tile)
    g_pad = _round_up(g, _SUBLANE)
    f0_pad = _round_up(f0, _LANE)

    # Pad to lane/sublane-aligned, lane-dense shapes; streamed operands
    # (Ahat, per-layer x, pool) are bf16; accumulation stays f32 in-kernel.
    ahat_p = jnp.zeros((n_pad, n_pad), stream_dtype).at[:n, :n].set(
        ahat.astype(stream_dtype))
    x_p = jnp.zeros((n_pad, f0_pad), stream_dtype).at[:n, :f0].set(
        x.astype(stream_dtype))
    pool_p = jnp.zeros((g_pad, n_pad), stream_dtype).at[:g, :n].set(
        pool_mat.astype(stream_dtype))

    for (w_rel, w_root, b) in params:
        f_in, h_out = w_rel.shape
        f_pad = _round_up(f_in, _LANE)
        h_pad = _round_up(h_out, _LANE)
        assert x_p.shape[1] == f_pad
        # Stack [w_rel ; w_root] in bf16 so both per-layer matmuls fuse into a
        # single native-bf16 MXU dot in the kernel epilogue.
        w_cat = jnp.zeros((2 * f_pad, h_pad), jnp.bfloat16)
        w_cat = w_cat.at[:f_in, :h_out].set(w_rel.astype(jnp.bfloat16))
        w_cat = w_cat.at[f_pad:f_pad + f_in, :h_out].set(w_root.astype(jnp.bfloat16))
        b_pad = jnp.zeros((1, h_pad), jnp.float32).at[:, :h_out].set(
            b.astype(jnp.float32))
        x_p = _graph_conv_layer(ahat_p, x_p, w_cat, b_pad,
                                tm=tile, tk=tile, out_dtype=stream_dtype)

    out = _global_mean_pool(pool_p, x_p, tk=tile)
    # JumpingKnowledge('cat') of a single readout is the identity.
    return out[:g, :h_final]


# ---------------------------------------------------------------------------
# Pure-JAX references
# ---------------------------------------------------------------------------
def reference_forward(ahat, pool_mat, x, params):
    """Full-f32 reference."""
    hp = lax.Precision.HIGHEST
    for (w_rel, w_root, b) in params:
        agg = jnp.dot(ahat, x, precision=hp)
        x = jax.nn.relu(jnp.dot(agg, w_rel, precision=hp)
                        + jnp.dot(x, w_root, precision=hp) + b)
    return jnp.dot(pool_mat, x, precision=hp)


def reference_forward_quantized(ahat, pool_mat, x, params):
    """Reference matching the kernel's bf16-stream / f32-accumulate numerics."""
    hp = lax.Precision.HIGHEST

    def bf(a):
        return a.astype(jnp.bfloat16).astype(jnp.float32)

    ahat_q = bf(ahat)
    xq = bf(x)
    for (w_rel, w_root, b) in params:
        agg = bf(jnp.dot(ahat_q, xq, precision=hp))          # f32 acc, bf16 round before weight dot
        h = (jnp.dot(agg, bf(w_rel), precision=hp)
             + jnp.dot(xq, bf(w_root), precision=hp)
             + b.astype(jnp.float32))
        xq = bf(jax.nn.relu(h))
    return jnp.dot(bf(pool_mat), xq, precision=hp)


# ---------------------------------------------------------------------------
# Graph-structure glue (plain JAX)
# ---------------------------------------------------------------------------
def build_adjacency(edge_index, num_nodes):
    src, dst = edge_index[0], edge_index[1]
    A = jnp.zeros((num_nodes, num_nodes), jnp.float32)
    A = A.at[dst, src].add(1.0)                       # A[i, j] = #edges j -> i
    deg = A.sum(axis=1, keepdims=True)
    return jnp.where(deg > 0, A / jnp.maximum(deg, 1.0), 0.0)


def build_pool_matrix(batch_idx, num_graphs):
    onehot = (batch_idx[None, :] == jnp.arange(num_graphs)[:, None]).astype(jnp.float32)
    counts = onehot.sum(axis=1, keepdims=True)
    return onehot / jnp.maximum(counts, 1.0)


if __name__ == "__main__":
    # Small deterministic problem: 2 graphs, 8 nodes each, 4 input features,
    # hidden_size = 32, gcn_layers = 2.
    num_graphs = 2
    nodes_per_graph = 8
    N = num_graphs * nodes_per_graph
    num_features = 4
    hidden_size = 32
    gcn_layers = 2

    # Deterministic edge list: directed ring (both directions) within each graph.
    srcs, dsts = [], []
    for gi in range(num_graphs):
        base = gi * nodes_per_graph
        for kk in range(nodes_per_graph):
            a = base + kk
            bnode = base + (kk + 1) % nodes_per_graph
            srcs += [a, bnode]
            dsts += [bnode, a]
    edge_index = jnp.array([srcs, dsts], dtype=jnp.int32)
    batch_idx = jnp.repeat(jnp.arange(num_graphs, dtype=jnp.int32), nodes_per_graph)

    key = jax.random.PRNGKey(0)
    key, kx = jax.random.split(key)
    x = jax.random.normal(kx, (N, num_features), dtype=jnp.float32)

    # Deterministic parameter init (PyTorch-Linear-like uniform 1/sqrt(fan_in)).
    params = []
    in_dim = num_features
    for _ in range(gcn_layers):
        key, k1, k2, k3 = jax.random.split(key, 4)
        scale = 1.0 / jnp.sqrt(jnp.float32(in_dim))
        w_rel = jax.random.uniform(k1, (in_dim, hidden_size), jnp.float32, -scale, scale)
        w_root = jax.random.uniform(k2, (in_dim, hidden_size), jnp.float32, -scale, scale)
        b = jax.random.uniform(k3, (1, hidden_size), jnp.float32, -scale, scale)
        params.append((w_rel, w_root, b))
        in_dim = hidden_size

    # Densify graph structure into matmul operands (plain-JAX glue).
    ahat = build_adjacency(edge_index, N)                 # [N, N]
    pool_mat = build_pool_matrix(batch_idx, num_graphs)   # [G, N]

    out = graph_feature_extract(ahat, pool_mat, x, params)
    out = jax.block_until_ready(out)
    assert out.shape == (num_graphs, hidden_size)

    # Numerics-matched reference (bf16 streamed operands / weights, f32 accumulation).
    ref_q = reference_forward_quantized(ahat, pool_mat, x, params)
    assert jnp.allclose(out, ref_q, atol=1e-3, rtol=1e-3), \
        "mismatch vs quantization-matched reference"

    # Sanity vs full-f32 reference (bf16 stream introduces ~1e-2-level error).
    ref_f32 = reference_forward(ahat, pool_mat, x, params)
    assert jnp.allclose(out, ref_f32, atol=5e-2, rtol=5e-2), \
        "mismatch vs full-f32 reference"

    print("KERNEL_OK")
</pallas_src>

<mosaic_0001>
module attributes {stable_mosaic.version = 11 : i64} {
  func.func @_graph_conv_kernel(%arg0: i32, %arg1: i32, %arg2: memref<128x128xbf16, #tpu.memory_space<vmem>>, %arg3: memref<128x128xbf16, #tpu.memory_space<vmem>>, %arg4: memref<128x128xbf16, #tpu.memory_space<vmem>>, %arg5: memref<256x128xbf16, #tpu.memory_space<vmem>>, %arg6: memref<1x128xf32, #tpu.memory_space<vmem>>, %arg7: memref<128x128xbf16, #tpu.memory_space<vmem>>, %arg8: memref<128x256xf32, #tpu.memory_space<vmem>>) attributes {dimension_semantics = [#tpu.dimension_semantics<parallel>, #tpu.dimension_semantics<arbitrary>], iteration_bounds = array<i64: 1, 1>, scalar_prefetch = 0 : i64, scratch_operands = 1 : i64, tpu.core_type = #tpu.core_type<tc>, window_params = [{transform_indices = @transform_0, window_bounds = array<i64: 128, 128>}, {transform_indices = @transform_1, window_bounds = array<i64: 128, 128>}, {transform_indices = @transform_2, window_bounds = array<i64: 128, 128>}, {pipeline_mode = #tpu.pipeline_mode<synchronous>, transform_indices = @transform_3, window_bounds = array<i64: 256, 128>}, {pipeline_mode = #tpu.pipeline_mode<synchronous>, transform_indices = @transform_4, window_bounds = array<i64: 1, 128>}, {transform_indices = @transform_5, window_bounds = array<i64: 128, 128>}]} {
    %c0_i32 = arith.constant 0 : i32
    %0 = arith.cmpi eq, %arg1, %c0_i32 : i32
    %1 = arith.extui %0 : i1 to i32
    %c0_i32_0 = arith.constant 0 : i32
    %2 = arith.cmpi ne, %1, %c0_i32_0 : i32
    scf.if %2 {
      %cst_10 = arith.constant 0.000000e+00 : f32
      %12 = vector.broadcast %cst_10 : f32 to vector<128x128xf32>
      %c0_11 = arith.constant 0 : index
      %c0_12 = arith.constant 0 : index
      %13 = vector.load %arg8[%c0_11, %c0_12] : memref<128x256xf32, #tpu.memory_space<vmem>>, vector<128x128xf32>
      tpu.vector_store %arg8[%c0_11, %c0_12], %12 {strides = array<i32>} : memref<128x256xf32, #tpu.memory_space<vmem>>, vector<128x128xf32>,
      %c0_13 = arith.constant 0 : index
      %c0_14 = arith.constant 0 : index
      %14 = vector.load %arg4[%c0_13, %c0_14] : memref<128x128xbf16, #tpu.memory_space<vmem>>, vector<128x128xbf16>
      %15 = arith.extf %14 : vector<128x128xbf16> to vector<128x128xf32>
      %c0_15 = arith.constant 0 : index
      %c128 = arith.constant 128 : index
      %16 = vector.load %arg8[%c0_15, %c128] : memref<128x256xf32, #tpu.memory_space<vmem>>, vector<128x128xf32>
      tpu.vector_store %arg8[%c0_15, %c128], %15 {strides = array<i32>} : memref<128x256xf32, #tpu.memory_space<vmem>>, vector<128x128xf32>,
    } else {
    }
    %c0 = arith.constant 0 : index
    %c0_1 = arith.constant 0 : index
    %3 = vector.load %arg8[%c0, %c0_1] : memref<128x256xf32, #tpu.memory_space<vmem>>, vector<128x128xf32>
    %c0_2 = arith.constant 0 : index
    %c0_3 = arith.constant 0 : index
    %4 = vector.load %arg2[%c0_2, %c0_3] : memref<128x128xbf16, #tpu.memory_space<vmem>>, vector<128x128xbf16>
    %c0_4 = arith.constant 0 : index
    %c0_5 = arith.constant 0 : index
    %5 = vector.load %arg3[%c0_4, %c0_5] : memref<128x128xbf16, #tpu.memory_space<vmem>>, vector<128x128xbf16>
    %cst = arith.constant dense<0.000000e+00> : vector<128x128xf32>
    %6 = tpu.matmul %4, %5, %cst {dimension_numbers = #tpu.dot_dimension_numbers<[1], [0], [0], [1], [0, 0, 1, 1], [], []>} : vector<128x128xbf16>, vector<128x128xbf16>, vector<128x128xf32> -> vector<128x128xf32>
    %7 = arith.addf %3, %6 : vector<128x128xf32>
    %c0_6 = arith.constant 0 : index
    %c0_7 = arith.constant 0 : index
    %8 = vector.load %arg8[%c0_6, %c0_7] : memref<128x256xf32, #tpu.memory_space<vmem>>, vector<128x128xf32>
    tpu.vector_store %arg8[%c0_6, %c0_7], %7 {strides = array<i32>} : memref<128x256xf32, #tpu.memory_space<vmem>>, vector<128x128xf32>,
    %c0_i32_8 = arith.constant 0 : i32
    %9 = arith.cmpi eq, %arg1, %c0_i32_8 : i32
    %10 = arith.extui %9 : i1 to i32
    %c0_i32_9 = arith.constant 0 : i32
    %11 = arith.cmpi ne, %10, %c0_i32_9 : i32
    scf.if %11 {
      %c0_10 = arith.constant 0 : index
      %c0_11 = arith.constant 0 : index
      %12 = vector.load %arg8[%c0_10, %c0_11] : memref<128x256xf32, #tpu.memory_space<vmem>>, vector<128x256xf32>
      %13 = arith.truncf %12 : vector<128x256xf32> to vector<128x256xbf16>
      %c0_12 = arith.constant 0 : index
      %c0_13 = arith.constant 0 : index
      %14 = vector.load %arg5[%c0_12, %c0_13] : memref<256x128xbf16, #tpu.memory_space<vmem>>, vector<256x128xbf16>
      %cst_14 = arith.constant dense<0.000000e+00> : vector<128x128xf32>
      %15 = tpu.matmul %13, %14, %cst_14 {dimension_numbers = #tpu.dot_dimension_numbers<[1], [0], [0], [1], [0, 0, 1, 1], [], []>} : vector<128x256xbf16>, vector<256x128xbf16>, vector<128x128xf32> -> vector<128x128xf32>
      %c0_15 = arith.constant 0 : index
      %c0_16 = arith.constant 0 : index
      %16 = vector.load %arg6[%c0_15, %c0_16] : memref<1x128xf32, #tpu.memory_space<vmem>>, vector<1x128xf32>
      %17 = vector.broadcast %16 : vector<1x128xf32> to vector<128x128xf32>
      %18 = arith.addf %15, %17 : vector<128x128xf32>
      %cst_17 = arith.constant 0.000000e+00 : f32
      %19 = vector.broadcast %cst_17 : f32 to vector<128x128xf32>
      %20 = arith.maximumf %18, %19 : vector<128x128xf32>
      %21 = arith.truncf %20 : vector<128x128xf32> to vector<128x128xbf16>
      %c0_18 = arith.constant 0 : index
      %c0_19 = arith.constant 0 : index
      %22 = vector.load %arg7[%c0_18, %c0_19] : memref<128x128xbf16, #tpu.memory_space<vmem>>, vector<128x128xbf16>
      tpu.vector_store %arg7[%c0_18, %c0_19], %21 {strides = array<i32>} : memref<128x128xbf16, #tpu.memory_space<vmem>>, vector<128x128xbf16>,
    } else {
    }
    return
  }
  func.func @transform_0(%arg0: i32, %arg1: i32) -> (i32, i32) {
    %c0_i32 = arith.constant 0 : i32
    return %arg0, %arg1 : i32, i32
  }
  func.func @transform_1(%arg0: i32, %arg1: i32) -> (i32, i32) {
    %c0_i32 = arith.constant 0 : i32
    %c0_i32_0 = arith.constant 0 : i32
    return %arg1, %c0_i32 : i32, i32
  }
  func.func @transform_2(%arg0: i32, %arg1: i32) -> (i32, i32) {
    %c0_i32 = arith.constant 0 : i32
    %c0_i32_0 = arith.constant 0 : i32
    return %arg0, %c0_i32 : i32, i32
  }
  func.func @transform_3(%arg0: i32, %arg1: i32) -> (i32, i32) {
    %c0_i32 = arith.constant 0 : i32
    %c0_i32_0 = arith.constant 0 : i32
    %c0_i32_1 = arith.constant 0 : i32
    return %c0_i32, %c0_i32_0 : i32, i32
  }
  func.func @transform_4(%arg0: i32, %arg1: i32) -> (i32, i32) {
    %c0_i32 = arith.constant 0 : i32
    %c0_i32_0 = arith.constant 0 : i32
    %c0_i32_1 = arith.constant 0 : i32
    return %c0_i32, %c0_i32_0 : i32, i32
  }
  func.func @transform_5(%arg0: i32, %arg1: i32) -> (i32, i32) {
    %c0_i32 = arith.constant 0 : i32
    %c0_i32_0 = arith.constant 0 : i32
    return %arg0, %c0_i32 : i32, i32
  }
}

</mosaic_0001>

<llo_original>
// kernel: tpu_custom_call.1
$region0: #{tpu_custom_call.1}
  #allocation0 [shape = 'u32[]', space=smem, size = 0x4, offset = 0x4, fixed_abs, tag = 'smem constant byte address 0x4 - core index']
  #allocation1 [shape = 'u32[144,128]{1,0:T(1,128)}', space=vmem, size = 0x12000, scoped, tag = 'internal scratch']
  #allocation2 [shape = 'f32[128,256]{1,0:T(8,128)}', space=vmem, size = 0x20000, scoped, tag = 'scratch operand']
  %s0 = inlined_call_operand.hbm [shape: bf16[128,128], index: 0, kind: input, shape index: {}]
  %s1 = inlined_call_operand.hbm [shape: bf16[128,128], index: 1, kind: input, shape index: {}]
  %s2 = inlined_call_operand.hbm [shape: bf16[128,128], index: 2, kind: input, shape index: {}]
  %s3 = inlined_call_operand.hbm [shape: bf16[256,128], index: 3, kind: input, shape index: {}]
  %s4 = inlined_call_operand.vmem [shape: f32[1,128], index: 4, kind: input, shape index: {}]
  %s5 = inlined_call_operand.hbm [shape: bf16[128,128], index: 5, kind: output, shape index: {}]
  %s6 = sld [smem:[#allocation0]]
  $region54: #{tpu_custom_call.1} parent=0
    _
  %s8 = ssub.s32 1, %s6
  %s9 = scalar_select 0, %s8, %s6
  $region1: #{tpu_custom_call.1} parent=0
    #allocation3 [shape = 'u8[32768]{0}', space=vmem, size = 0x8000, scoped, tag = 'input window, operand 0, single buffered']
    #allocation4 [shape = 's32[1]{0}', space=sflag, size = 0x4, scoped, tag = 'scoped memory for tpu_custom_call.1']
    #allocation5 [shape = 's32[1]{0}', space=sflag, size = 0x4, scoped, tag = 'scoped memory for tpu_custom_call.1']
    #allocation6 [shape = 'u8[32768]{0}', space=vmem, size = 0x8000, scoped, tag = 'input window, operand 1, single buffered']
    #allocation7 [shape = 's32[1]{0}', space=sflag, size = 0x4, scoped, tag = 'scoped memory for tpu_custom_call.1']
    #allocation8 [shape = 'u8[32768]{0}', space=vmem, size = 0x8000, scoped, tag = 'input window, operand 2, single buffered']
    #allocation9 [shape = 'u8[65536]{0}', space=vmem, size = 0x10000, scoped, tag = 'input window, operand 3, single buffered']
    #allocation10 [shape = 's32[1]{0}', space=sflag, size = 0x4, scoped, tag = 'scoped memory for tpu_custom_call.1']
    #allocation11 [shape = 'u8[32768]{0}', space=vmem, size = 0x8000, scoped, tag = 'output window, operand 0, single buffered']
    %10 = vsyncpa [#allocation4], 0
    %11 = vsyncpa [#allocation7], 0
    %12 = vsyncpa [#allocation10], 0
    %13 = vsyncpa [#allocation5], 0
    // Predicated region
    $region2: #{tpu_custom_call.1} parent=1 // pred_check
      _
    $region3: #{tpu_custom_call.1} parent=1 // pred_check_branch
      %15 = sbr.rel (0) target = $region5
    $region4: #{tpu_custom_call.1} parent=1 // pred_region
      %s17 = ssub.s32 1024, 1024
      %18 = vsyncadd [#allocation4], %s17
      %s19 = sshll.u32 [#allocation3], 4
      %s20 = int_to_ptr.vmem [resolvable:$true] %s19
      %25 = dma.hbm_to_vmem [thread:$0]  %s0, 1024, %s20, [#allocation4], 64, 64, 4
    $region5: #{tpu_custom_call.1} parent=1 // pred_fallthru
      _
    // Predicated region
    $region6: #{tpu_custom_call.1} parent=1 // pred_check
      _
    $region7: #{tpu_custom_call.1} parent=1 // pred_check_branch
      %27 = sbr.rel (0) target = $region9
    $region8: #{tpu_custom_call.1} parent=1 // pred_region
      %s29 = ssub.s32 1024, 1024
      %30 = vsyncadd [#allocation7], %s29
      %s31 = sshll.u32 [#allocation6], 4
      %s32 = int_to_ptr.vmem [resolvable:$true] %s31
      %37 = dma.hbm_to_vmem [thread:$0]  %s1, 1024, %s32, [#allocation7], 64, 64, 4
    $region9: #{tpu_custom_call.1} parent=1 // pred_fallthru
      _
    // Predicated region
    $region10: #{tpu_custom_call.1} parent=1 // pred_check
      _
    $region11: #{tpu_custom_call.1} parent=1 // pred_check_branch
      %39 = sbr.rel (0) target = $region13
    $region12: #{tpu_custom_call.1} parent=1 // pred_region
      %s41 = ssub.s32 1024, 1024
      %42 = vsyncadd [#allocation7], %s41
      %s43 = sshll.u32 [#allocation8], 4
      %s44 = int_to_ptr.vmem [resolvable:$true] %s43
      %49 = dma.hbm_to_vmem [thread:$0]  %s2, 1024, %s44, [#allocation7], 64, 64, 4
    $region13: #{tpu_custom_call.1} parent=1 // pred_fallthru
      _
    // Predicated region
    $region14: #{tpu_custom_call.1} parent=1 // pred_check
      _
    $region15: #{tpu_custom_call.1} parent=1 // pred_check_branch
      %51 = sbr.rel (0) target = $region17
    $region16: #{tpu_custom_call.1} parent=1 // pred_region
      %s53 = ssub.s32 2048, 2048
      %54 = vsyncadd [#allocation10], %s53
      %s55 = sshll.u32 [#allocation9], 4
      %s56 = int_to_ptr.vmem [resolvable:$true] %s55
      %61 = dma.hbm_to_vmem [thread:$0]  %s3, 2048, %s56, [#allocation10], 64, 64, 4
    $region17: #{tpu_custom_call.1} parent=1 // pred_fallthru
      _
    // Predicated region
    $region18: #{tpu_custom_call.1} parent=1 // pred_check
      _
    $region19: #{tpu_custom_call.1} parent=1 // pred_check_branch
      %63 = sbr.rel (0) target = $region21
    $region20: #{tpu_custom_call.1} parent=1 // pred_region
      _
    $region21: #{tpu_custom_call.1} parent=1 // pred_fallthru
      _
    // Predicated region
    $region22: #{tpu_custom_call.1} parent=1 // pred_check
      _
    $region23: #{tpu_custom_call.1} parent=1 // pred_check_branch
      %65 = sbr.rel (0) target = $region25
    $region24: #{tpu_custom_call.1} parent=1 // pred_region
      %66 = dma.done [#allocation4], 1024
    $region25: #{tpu_custom_call.1} parent=1 // pred_fallthru
      _
    // Predicated region
    $region26: #{tpu_custom_call.1} parent=1 // pred_check
      _
    $region27: #{tpu_custom_call.1} parent=1 // pred_check_branch
      %68 = sbr.rel (0) target = $region29
    $region28: #{tpu_custom_call.1} parent=1 // pred_region
      %69 = dma.done [#allocation7], 1024
    $region29: #{tpu_custom_call.1} parent=1 // pred_fallthru
      _
    // Predicated region
    $region30: #{tpu_custom_call.1} parent=1 // pred_check
      _
    $region31: #{tpu_custom_call.1} parent=1 // pred_check_branch
      %71 = sbr.rel (0) target = $region33
    $region32: #{tpu_custom_call.1} parent=1 // pred_region
      %72 = dma.done [#allocation7], 1024
    $region33: #{tpu_custom_call.1} parent=1 // pred_fallthru
      _
    // Predicated region
    $region34: #{tpu_custom_call.1} parent=1 // pred_check
      _
    $region35: #{tpu_custom_call.1} parent=1 // pred_check_branch
      %74 = sbr.rel (0) target = $region37
    $region36: #{tpu_custom_call.1} parent=1 // pred_region
      %75 = dma.done [#allocation10], 2048
    $region37: #{tpu_custom_call.1} parent=1 // pred_fallthru
      _
    %p77 = scmp.eq.s32.totalorder 0, 0
    // Predicated region
    $region38: #{tpu_custom_call.1} parent=1 // pred_check
      %p78 = pneg %p77
    $region39: #{tpu_custom_call.1} parent=1 // pred_check_branch
      %80 = sbr.rel (%p78) target = $region41
    $region40: #{tpu_custom_call.1} parent=1 // pred_region
      %81 = vst [vmem:[#allocation2] sm:$0xff] 0.0
      %82 = vst [vmem:[#allocation2 + $0x10] sm:$0xff] 0.0
      %83 = vst [vmem:[#allocation2 + $0x20] sm:$0xff] 0.0
      %84 = vst [vmem:[#allocation2 + $0x30] sm:$0xff] 0.0
      %85 = vst [vmem:[#allocation2 + $0x40] sm:$0xff] 0.0
      %86 = vst [vmem:[#allocation2 + $0x50] sm:$0xff] 0.0
      %87 = vst [vmem:[#allocation2 + $0x60] sm:$0xff] 0.0
      %88 = vst [vmem:[#allocation2 + $0x70] sm:$0xff] 0.0
      %89 = vst [vmem:[#allocation2 + $0x80] sm:$0xff] 0.0
      %90 = vst [vmem:[#allocation2 + $0x90] sm:$0xff] 0.0
      %91 = vst [vmem:[#allocation2 + $0xa0] sm:$0xff] 0.0
      %92 = vst [vmem:[#allocation2 + $0xb0] sm:$0xff] 0.0
      %93 = vst [vmem:[#allocation2 + $0xc0] sm:$0xff] 0.0
      %94 = vst [vmem:[#allocation2 + $0xd0] sm:$0xff] 0.0
      %95 = vst [vmem:[#allocation2 + $0xe0] sm:$0xff] 0.0
      %96 = vst [vmem:[#allocation2 + $0xf0] sm:$0xff] 0.0
      %v97 = vld [vmem:[#allocation8] sm:$0xf]
      %v98 = vld [vmem:[#allocation8 + $0x4] sm:$0xf]
      %v99 = vld [vmem:[#allocation8 + $0x8] sm:$0xf]
      %v100 = vld [vmem:[#allocation8 + $0xc] sm:$0xf]
      %v101 = vld [vmem:[#allocation8 + $0x10] sm:$0xf]
      %v102 = vld [vmem:[#allocation8 + $0x14] sm:$0xf]
      %v103 = vld [vmem:[#allocation8 + $0x18] sm:$0xf]
      %v104 = vld [vmem:[#allocation8 + $0x1c] sm:$0xf]
      %v105 = vld [vmem:[#allocation8 + $0x20] sm:$0xf]
      %v106 = vld [vmem:[#allocation8 + $0x24] sm:$0xf]
      %v107 = vld [vmem:[#allocation8 + $0x28] sm:$0xf]
      %v108 = vld [vmem:[#allocation8 + $0x2c] sm:$0xf]
      %v109 = vld [vmem:[#allocation8 + $0x30] sm:$0xf]
      %v110 = vld [vmem:[#allocation8 + $0x34] sm:$0xf]
      %v111 = vld [vmem:[#allocation8 + $0x38] sm:$0xf]
      %v112 = vld [vmem:[#allocation8 + $0x3c] sm:$0xf]
      %v113 = vunpack.c.l.bf16 %v97
      %v114 = vunpack.c.l.bf16 %v98
      %v115 = vunpack.c.l.bf16 %v99
      %v116 = vunpack.c.l.bf16 %v100
      %v117 = vunpack.c.l.bf16 %v101
      %v118 = vunpack.c.l.bf16 %v102
      %v119 = vunpack.c.l.bf16 %v103
      %v120 = vunpack.c.l.bf16 %v104
      %v121 = vunpack.c.l.bf16 %v105
      %v122 = vunpack.c.l.bf16 %v106
      %v123 = vunpack.c.l.bf16 %v107
      %v124 = vunpack.c.l.bf16 %v108
      %v125 = vunpack.c.l.bf16 %v109
      %v126 = vunpack.c.l.bf16 %v110
      %v127 = vunpack.c.l.bf16 %v111
      %v128 = vunpack.c.l.bf16 %v112
      %129 = vst [vmem:[#allocation2 + $0x8] sm:$0xff] %v113
      %130 = vst [vmem:[#allocation2 + $0x18] sm:$0xff] %v114
      %131 = vst [vmem:[#allocation2 + $0x28] sm:$0xff] %v115
      %132 = vst [vmem:[#allocation2 + $0x38] sm:$0xff] %v116
      %133 = vst [vmem:[#allocation2 + $0x48] sm:$0xff] %v117
      %134 = vst [vmem:[#allocation2 + $0x58] sm:$0xff] %v118
      %135 = vst [vmem:[#allocation2 + $0x68] sm:$0xff] %v119
      %136 = vst [vmem:[#allocation2 + $0x78] sm:$0xff] %v120
      %137 = vst [vmem:[#allocation2 + $0x88] sm:$0xff] %v121
      %138 = vst [vmem:[#allocation2 + $0x98] sm:$0xff] %v122
      %139 = vst [vmem:[#allocation2 + $0xa8] sm:$0xff] %v123
      %140 = vst [vmem:[#allocation2 + $0xb8] sm:$0xff] %v124
      %141 = vst [vmem:[#allocation2 + $0xc8] sm:$0xff] %v125
      %142 = vst [vmem:[#allocation2 + $0xd8] sm:$0xff] %v126
      %143 = vst [vmem:[#allocation2 + $0xe8] sm:$0xff] %v127
      %144 = vst [vmem:[#allocation2 + $0xf8] sm:$0xff] %v128
    $region41: #{tpu_custom_call.1} parent=1 // pred_fallthru
      _
    %v145 = vld [vmem:[#allocation2] sm:$0xff]
    %v146 = vld [vmem:[#allocation2 + $0x10] sm:$0xff]
    %v147 = vld [vmem:[#allocation2 + $0x20] sm:$0xff]
    %v148 = vld [vmem:[#allocation2 + $0x30] sm:$0xff]
    %v149 = vld [vmem:[#allocation2 + $0x40] sm:$0xff]
    %v150 = vld [vmem:[#allocation2 + $0x50] sm:$0xff]
    %v151 = vld [vmem:[#allocation2 + $0x60] sm:$0xff]
    %v152 = vld [vmem:[#allocation2 + $0x70] sm:$0xff]
    %v153 = vld [vmem:[#allocation2 + $0x80] sm:$0xff]
    %v154 = vld [vmem:[#allocation2 + $0x90] sm:$0xff]
    %v155 = vld [vmem:[#allocation2 + $0xa0] sm:$0xff]
    %v156 = vld [vmem:[#allocation2 + $0xb0] sm:$0xff]
    %v157 = vld [vmem:[#allocation2 + $0xc0] sm:$0xff]
    %v158 = vld [vmem:[#allocation2 + $0xd0] sm:$0xff]
    %v159 = vld [vmem:[#allocation2 + $0xe0] sm:$0xff]
    %v160 = vld [vmem:[#allocation2 + $0xf0] sm:$0xff]
    %v161 = vld [vmem:[#allocation3] sm:$0xf]
    %v162 = vld [vmem:[#allocation3 + $0x4] sm:$0xf]
    %v163 = vld [vmem:[#allocation3 + $0x8] sm:$0xf]
    %v164 = vld [vmem:[#allocation3 + $0xc] sm:$0xf]
    %v165 = vld [vmem:[#allocation3 + $0x10] sm:$0xf]
    %v166 = vld [vmem:[#allocation3 + $0x14] sm:$0xf]
    %v167 = vld [vmem:[#allocation3 + $0x18] sm:$0xf]
    %v168 = vld [vmem:[#allocation3 + $0x1c] sm:$0xf]
    %v169 = vld [vmem:[#allocation3 + $0x20] sm:$0xf]
    %v170 = vld [vmem:[#allocation3 + $0x24] sm:$0xf]
    %v171 = vld [vmem:[#allocation3 + $0x28] sm:$0xf]
    %v172 = vld [vmem:[#allocation3 + $0x2c] sm:$0xf]
    %v173 = vld [vmem:[#allocation3 + $0x30] sm:$0xf]
    %v174 = vld [vmem:[#allocation3 + $0x34] sm:$0xf]
    %v175 = vld [vmem:[#allocation3 + $0x38] sm:$0xf]
    %v176 = vld [vmem:[#allocation3 + $0x3c] sm:$0xf]
    %v177 = vld [vmem:[#allocation6] sm:$0xf]
    %v178 = vld [vmem:[#allocation6 + $0x4] sm:$0xf]
    %v179 = vld [vmem:[#allocation6 + $0x8] sm:$0xf]
    %v180 = vld [vmem:[#allocation6 + $0xc] sm:$0xf]
    %v181 = vld [vmem:[#allocation6 + $0x10] sm:$0xf]
    %v182 = vld [vmem:[#allocation6 + $0x14] sm:$0xf]
    %v183 = vld [vmem:[#allocation6 + $0x18] sm:$0xf]
    %v184 = vld [vmem:[#allocation6 + $0x1c] sm:$0xf]
    %v185 = vld [vmem:[#allocation6 + $0x20] sm:$0xf]
    %v186 = vld [vmem:[#allocation6 + $0x24] sm:$0xf]
    %v187 = vld [vmem:[#allocation6 + $0x28] sm:$0xf]
    %v188 = vld [vmem:[#allocation6 + $0x2c] sm:$0xf]
    %v189 = vld [vmem:[#allocation6 + $0x30] sm:$0xf]
    %v190 = vld [vmem:[#allocation6 + $0x34] sm:$0xf]
    %v191 = vld [vmem:[#allocation6 + $0x38] sm:$0xf]
    %v192 = vld [vmem:[#allocation6 + $0x3c] sm:$0xf]
    %v209 = vunpack.c.l.b16 %v161
    %v210 = vunpack.c.l.b16 %v162
    %v211 = vunpack.c.l.b16 %v163
    %v212 = vunpack.c.l.b16 %v164
    %v213 = vunpack.c.l.b16 %v165
    %v214 = vunpack.c.l.b16 %v166
    %v215 = vunpack.c.l.b16 %v167
    %v216 = vunpack.c.l.b16 %v168
    %v217 = vunpack.c.l.b16 %v169
    %v218 = vunpack.c.l.b16 %v170
    %v219 = vunpack.c.l.b16 %v171
    %v220 = vunpack.c.l.b16 %v172
    %v221 = vunpack.c.l.b16 %v173
    %v222 = vunpack.c.l.b16 %v174
    %v223 = vunpack.c.l.b16 %v175
    %v224 = vunpack.c.l.b16 %v176
    %v225 = vpack.c.b16 %v210, %v209
    %v226 = vpack.c.b16 %v212, %v211
    %v227 = vpack.c.b16 %v214, %v213
    %v228 = vpack.c.b16 %v216, %v215
    %v229 = vpack.c.b16 %v218, %v217
    %v230 = vpack.c.b16 %v220, %v219
    %v231 = vpack.c.b16 %v222, %v221
    %v232 = vpack.c.b16 %v224, %v223
    %v257 = vunpack.c.l.b16 %v177
    %v258 = vunpack.c.l.b16 %v178
    %v259 = vunpack.c.l.b16 %v179
    %v260 = vunpack.c.l.b16 %v180
    %v261 = vunpack.c.l.b16 %v181
    %v262 = vunpack.c.l.b16 %v182
    %v263 = vunpack.c.l.b16 %v183
    %v264 = vunpack.c.l.b16 %v184
    %v265 = vunpack.c.l.b16 %v185
    %v266 = vunpack.c.l.b16 %v186
    %v267 = vunpack.c.l.b16 %v187
    %v268 = vunpack.c.l.b16 %v188
    %v269 = vunpack.c.l.b16 %v189
    %v270 = vunpack.c.l.b16 %v190
    %v271 = vunpack.c.l.b16 %v191
    %v272 = vunpack.c.l.b16 %v192
    %v273 = vpack.c.b16 %v258, %v257
    %v274 = vpack.c.b16 %v260, %v259
    %v275 = vpack.c.b16 %v262, %v261
    %v276 = vpack.c.b16 %v264, %v263
    %v277 = vpack.c.b16 %v266, %v265
    %v278 = vpack.c.b16 %v268, %v267
    %v279 = vpack.c.b16 %v270, %v269
    %v280 = vpack.c.b16 %v272, %v271
    %289 = vmatprep.subr.bf16.mxu0 0
    %290 = vmatpush1.bf16.msra.mxu0 %v280
    %291 = vmatprep.subr.bf16.mxu0 0
    %292 = vmatpush1.bf16.msra.mxu0 %v279
    %293 = vmatprep.subr.bf16.mxu0 0
    %294 = vmatpush1.bf16.msra.mxu0 %v278
    %295 = vmatprep.subr.bf16.mxu0 0
    %296 = vmatpush1.bf16.msra.mxu0 %v277
    %297 = vmatprep.subr.bf16.mxu0 0
    %298 = vmatpush1.bf16.msra.mxu0 %v276
    %299 = vmatprep.subr.bf16.mxu0 0
    %300 = vmatpush1.bf16.msra.mxu0 %v275
    %301 = vmatprep.subr.bf16.mxu0 0
    %302 = vmatpush1.bf16.msra.mxu0 %v274
    %303 = vmatprep.subr.bf16.mxu0 0
    %304 = vmatpush1.bf16.msra.mxu0 %v273
    %305 = vmatprep.subr.bf16.mxu0 0
    %306 = vmatpush2.bf16.msra.mxu0 0
    %307 = vmatprep.subr.bf16.mxu0 0
    %308 = vmatpush2.bf16.msra.mxu0 0
    %309 = vmatprep.subr.bf16.mxu0 0
    %310 = vmatpush2.bf16.msra.mxu0 0
    %311 = vmatprep.subr.bf16.mxu0 0
    %312 = vmatpush2.bf16.msra.mxu0 0
    %313 = vmatprep.subr.bf16.mxu0 0
    %314 = vmatpush2.bf16.msra.mxu0 0
    %315 = vmatprep.subr.bf16.mxu0 0
    %316 = vmatpush2.bf16.msra.mxu0 0
    %317 = vmatprep.subr.bf16.mxu0 0
    %318 = vmatpush2.bf16.msra.mxu0 0
    %319 = vmatprep.subr.bf16.mxu0 0
    %320 = vmatpush2.bf16.msra.mxu0 0
    %321 = vmatprep.mubr.bf16.mxu0 0
    %322 = vmatmul.mubr.bf16.gmra.mxu0 %v225
    %v323 = vpop.f32.mrf.mxu0
    %v324 = vadd.f32 0.0, %v323
    %v325 = vpop.f32.mrf.mxu0
    %v326 = vpop.f32.mrf.mxu0
    %v327 = vadd.f32 0.0, %v326
    %v328 = vpop.f32.mrf.mxu0
    %329 = vmatprep.mubr.bf16.mxu0 0
    %330 = vmatmul.mubr.bf16.gmra.mxu0 %v226
    %v331 = vpop.f32.mrf.mxu0
    %v332 = vadd.f32 0.0, %v331
    %v333 = vpop.f32.mrf.mxu0
    %v334 = vpop.f32.mrf.mxu0
    %v335 = vadd.f32 0.0, %v334
    %v336 = vpop.f32.mrf.mxu0
    %337 = vmatprep.mubr.bf16.mxu0 0
    %338 = vmatmul.mubr.bf16.gmra.mxu0 %v227
    %v339 = vpop.f32.mrf.mxu0
    %v340 = vadd.f32 0.0, %v339
    %v341 = vpop.f32.mrf.mxu0
    %v342 = vpop.f32.mrf.mxu0
    %v343 = vadd.f32 0.0, %v342
    %v344 = vpop.f32.mrf.mxu0
    %345 = vmatprep.mubr.bf16.mxu0 0
    %346 = vmatmul.mubr.bf16.gmra.mxu0 %v228
    %v347 = vpop.f32.mrf.mxu0
    %v348 = vadd.f32 0.0, %v347
    %v349 = vpop.f32.mrf.mxu0
    %v350 = vpop.f32.mrf.mxu0
    %v351 = vadd.f32 0.0, %v350
    %v352 = vpop.f32.mrf.mxu0
    %353 = vmatprep.mubr.bf16.mxu0 0
    %354 = vmatmul.mubr.bf16.gmra.mxu0 %v229
    %v355 = vpop.f32.mrf.mxu0
    %v356 = vadd.f32 0.0, %v355
    %v357 = vpop.f32.mrf.mxu0
    %v358 = vpop.f32.mrf.mxu0
    %v359 = vadd.f32 0.0, %v358
    %v360 = vpop.f32.mrf.mxu0
    %361 = vmatprep.mubr.bf16.mxu0 0
    %362 = vmatmul.mubr.bf16.gmra.mxu0 %v230
    %v363 = vpop.f32.mrf.mxu0
    %v364 = vadd.f32 0.0, %v363
    %v365 = vpop.f32.mrf.mxu0
    %v366 = vpop.f32.mrf.mxu0
    %v367 = vadd.f32 0.0, %v366
    %v368 = vpop.f32.mrf.mxu0
    %369 = vmatprep.mubr.bf16.mxu0 0
    %370 = vmatmul.mubr.bf16.gmra.mxu0 %v231
    %v371 = vpop.f32.mrf.mxu0
    %v372 = vadd.f32 0.0, %v371
    %v373 = vpop.f32.mrf.mxu0
    %v374 = vpop.f32.mrf.mxu0
    %v375 = vadd.f32 0.0, %v374
    %v376 = vpop.f32.mrf.mxu0
    %377 = vmatprep.mubr.bf16.mxu0 0
    %378 = vmatmul.mubr.bf16.gmra.mxu0 %v232
    %v379 = vpop.f32.mrf.mxu0
    %v380 = vadd.f32 0.0, %v379
    %v381 = vpop.f32.mrf.mxu0
    %v382 = vpop.f32.mrf.mxu0
    %v383 = vadd.f32 0.0, %v382
    %v384 = vpop.f32.mrf.mxu0
    %385 = vdwg.mxu0
    %v386 = vadd.f32 %v145, %v324
    %v387 = vadd.f32 %v146, %v327
    %v388 = vadd.f32 %v147, %v332
    %v389 = vadd.f32 %v148, %v335
    %v390 = vadd.f32 %v149, %v340
    %v391 = vadd.f32 %v150, %v343
    %v392 = vadd.f32 %v151, %v348
    %v393 = vadd.f32 %v152, %v351
    %v394 = vadd.f32 %v153, %v356
    %v395 = vadd.f32 %v154, %v359
    %v396 = vadd.f32 %v155, %v364
    %v397 = vadd.f32 %v156, %v367
    %v398 = vadd.f32 %v157, %v372
    %v399 = vadd.f32 %v158, %v375
    %v400 = vadd.f32 %v159, %v380
    %v401 = vadd.f32 %v160, %v383
    %402 = vst [vmem:[#allocation2] sm:$0xff] %v386
    %403 = vst [vmem:[#allocation2 + $0x10] sm:$0xff] %v387
    %404 = vst [vmem:[#allocation2 + $0x20] sm:$0xff] %v388
    %405 = vst [vmem:[#allocation2 + $0x30] sm:$0xff] %v389
    %406 = vst [vmem:[#allocation2 + $0x40] sm:$0xff] %v390
    %407 = vst [vmem:[#allocation2 + $0x50] sm:$0xff] %v391
    %408 = vst [vmem:[#allocation2 + $0x60] sm:$0xff] %v392
    %409 = vst [vmem:[#allocation2 + $0x70] sm:$0xff] %v393
    %410 = vst [vmem:[#allocation2 + $0x80] sm:$0xff] %v394
    %411 = vst [vmem:[#allocation2 + $0x90] sm:$0xff] %v395
    %412 = vst [vmem:[#allocation2 + $0xa0] sm:$0xff] %v396
    %413 = vst [vmem:[#allocation2 + $0xb0] sm:$0xff] %v397
    %414 = vst [vmem:[#allocation2 + $0xc0] sm:$0xff] %v398
    %415 = vst [vmem:[#allocation2 + $0xd0] sm:$0xff] %v399
    %416 = vst [vmem:[#allocation2 + $0xe0] sm:$0xff] %v400
    %417 = vst [vmem:[#allocation2 + $0xf0] sm:$0xff] %v401
    // Predicated region
    $region42: #{tpu_custom_call.1} parent=1 // pred_check
      %p418 = pneg %p77
    $region43: #{tpu_custom_call.1} parent=1 // pred_check_branch
      %420 = sbr.rel (%p418) target = $region45
    $region44: #{tpu_custom_call.1} parent=1 // pred_region
      %v421 = vld [vmem:[#allocation2] sm:$0xff]
      %v422 = vld [vmem:[#allocation2 + $0x8] sm:$0xff]
      %v423 = vld [vmem:[#allocation2 + $0x10] sm:$0xff]
      %v424 = vld [vmem:[#allocation2 + $0x18] sm:$0xff]
      %v425 = vld [vmem:[#allocation2 + $0x20] sm:$0xff]
      %v426 = vld [vmem:[#allocation2 + $0x28] sm:$0xff]
      %v427 = vld [vmem:[#allocation2 + $0x30] sm:$0xff]
      %v428 = vld [vmem:[#allocation2 + $0x38] sm:$0xff]
      %v429 = vld [vmem:[#allocation2 + $0x40] sm:$0xff]
      %v430 = vld [vmem:[#allocation2 + $0x48] sm:$0xff]
      %v431 = vld [vmem:[#allocation2 + $0x50] sm:$0xff]
      %v432 = vld [vmem:[#allocation2 + $0x58] sm:$0xff]
      %v433 = vld [vmem:[#allocation2 + $0x60] sm:$0xff]
      %v434 = vld [vmem:[#allocation2 + $0x68] sm:$0xff]
      %v435 = vld [vmem:[#allocation2 + $0x70] sm:$0xff]
      %v436 = vld [vmem:[#allocation2 + $0x78] sm:$0xff]
      %v437 = vld [vmem:[#allocation2 + $0x80] sm:$0xff]
      %v438 = vld [vmem:[#allocation2 + $0x88] sm:$0xff]
      %v439 = vld [vmem:[#allocation2 + $0x90] sm:$0xff]
      %v440 = vld [vmem:[#allocation2 + $0x98] sm:$0xff]
      %v441 = vld [vmem:[#allocation2 + $0xa0] sm:$0xff]
      %v442 = vld [vmem:[#allocation2 + $0xa8] sm:$0xff]
      %v443 = vld [vmem:[#allocation2 + $0xb0] sm:$0xff]
      %v444 = vld [vmem:[#allocation2 + $0xb8] sm:$0xff]
      %v445 = vld [vmem:[#allocation2 + $0xc0] sm:$0xff]
      %v446 = vld [vmem:[#allocation2 + $0xc8] sm:$0xff]
      %v447 = vld [vmem:[#allocation2 + $0xd0] sm:$0xff]
      %v448 = vld [vmem:[#allocation2 + $0xd8] sm:$0xff]
      %v449 = vld [vmem:[#allocation2 + $0xe0] sm:$0xff]
      %v450 = vld [vmem:[#allocation2 + $0xe8] sm:$0xff]
      %v451 = vld [vmem:[#allocation2 + $0xf0] sm:$0xff]
      %v452 = vld [vmem:[#allocation2 + $0xf8] sm:$0xff]
      %v453 = vpack.c.bf16 %v423, %v421
      %v454 = vpack.c.bf16 %v424, %v422
      %v455 = vpack.c.bf16 %v427, %v425
      %v456 = vpack.c.bf16 %v428, %v426
      %v457 = vpack.c.bf16 %v431, %v429
      %v458 = vpack.c.bf16 %v432, %v430
      %v459 = vpack.c.bf16 %v435, %v433
      %v460 = vpack.c.bf16 %v436, %v434
      %v461 = vpack.c.bf16 %v439, %v437
      %v462 = vpack.c.bf16 %v440, %v438
      %v463 = vpack.c.bf16 %v443, %v441
      %v464 = vpack.c.bf16 %v444, %v442
      %v465 = vpack.c.bf16 %v447, %v445
      %v466 = vpack.c.bf16 %v448, %v446
      %v467 = vpack.c.bf16 %v451, %v449
      %v468 = vpack.c.bf16 %v452, %v450
      %v469 = vld [vmem:[#allocation9] sm:$0xf]
      %v470 = vld [vmem:[#allocation9 + $0x4] sm:$0xf]
      %v471 = vld [vmem:[#allocation9 + $0x8] sm:$0xf]
      %v472 = vld [vmem:[#allocation9 + $0xc] sm:$0xf]
      %v473 = vld [vmem:[#allocation9 + $0x10] sm:$0xf]
      %v474 = vld [vmem:[#allocation9 + $0x14] sm:$0xf]
      %v475 = vld [vmem:[#allocation9 + $0x18] sm:$0xf]
      %v476 = vld [vmem:[#allocation9 + $0x1c] sm:$0xf]
      %v477 = vld [vmem:[#allocation9 + $0x20] sm:$0xf]
      %v478 = vld [vmem:[#allocation9 + $0x24] sm:$0xf]
      %v479 = vld [vmem:[#allocation9 + $0x28] sm:$0xf]
      %v480 = vld [vmem:[#allocation9 + $0x2c] sm:$0xf]
      %v481 = vld [vmem:[#allocation9 + $0x30] sm:$0xf]
      %v482 = vld [vmem:[#allocation9 + $0x34] sm:$0xf]
      %v483 = vld [vmem:[#allocation9 + $0x38] sm:$0xf]
      %v484 = vld [vmem:[#allocation9 + $0x3c] sm:$0xf]
      %v485 = vld [vmem:[#allocation9 + $0x40] sm:$0xf]
      %v486 = vld [vmem:[#allocation9 + $0x44] sm:$0xf]
      %v487 = vld [vmem:[#allocation9 + $0x48] sm:$0xf]
      %v488 = vld [vmem:[#allocation9 + $0x4c] sm:$0xf]
      %v489 = vld [vmem:[#allocation9 + $0x50] sm:$0xf]
      %v490 = vld [vmem:[#allocation9 + $0x54] sm:$0xf]
      %v491 = vld [vmem:[#allocation9 + $0x58] sm:$0xf]
      %v492 = vld [vmem:[#allocation9 + $0x5c] sm:$0xf]
      %v493 = vld [vmem:[#allocation9 + $0x60] sm:$0xf]
      %v494 = vld [vmem:[#allocation9 + $0x64] sm:$0xf]
      %v495 = vld [vmem:[#allocation9 + $0x68] sm:$0xf]
      %v496 = vld [vmem:[#allocation9 + $0x6c] sm:$0xf]
      %v497 = vld [vmem:[#allocation9 + $0x70] sm:$0xf]
      %v498 = vld [vmem:[#allocation9 + $0x74] sm:$0xf]
      %v499 = vld [vmem:[#allocation9 + $0x78] sm:$0xf]
      %v500 = vld [vmem:[#allocation9 + $0x7c] sm:$0xf]
      %v501 = vld [vmem:[%s4] sm:$0x1]
      %v503 = vlaneseq
      %v504 = vshrl.u32 %v503, 7
      %v505 = vsub.s32 0, %v504
      %v506 = vrot.slane %v501, %v505
      %v540 = vunpack.c.l.b16 %v469
      %v541 = vunpack.c.l.b16 %v470
      %v542 = vunpack.c.l.b16 %v471
      %v543 = vunpack.c.l.b16 %v472
      %v544 = vunpack.c.l.b16 %v473
      %v545 = vunpack.c.l.b16 %v474
      %v546 = vunpack.c.l.b16 %v475
      %v547 = vunpack.c.l.b16 %v476
      %v548 = vunpack.c.l.b16 %v477
      %v549 = vunpack.c.l.b16 %v478
      %v550 = vunpack.c.l.b16 %v479
      %v551 = vunpack.c.l.b16 %v480
      %v552 = vunpack.c.l.b16 %v481
      %v553 = vunpack.c.l.b16 %v482
      %v554 = vunpack.c.l.b16 %v483
      %v555 = vunpack.c.l.b16 %v484
      %v556 = vunpack.c.l.b16 %v485
      %v557 = vunpack.c.l.b16 %v486
      %v558 = vunpack.c.l.b16 %v487
      %v559 = vunpack.c.l.b16 %v488
      %v560 = vunpack.c.l.b16 %v489
      %v561 = vunpack.c.l.b16 %v490
      %v562 = vunpack.c.l.b16 %v491
      %v563 = vunpack.c.l.b16 %v492
      %v564 = vunpack.c.l.b16 %v493
      %v565 = vunpack.c.l.b16 %v494
      %v566 = vunpack.c.l.b16 %v495
      %v567 = vunpack.c.l.b16 %v496
      %v568 = vunpack.c.l.b16 %v497
      %v569 = vunpack.c.l.b16 %v498
      %v570 = vunpack.c.l.b16 %v499
      %v571 = vunpack.c.l.b16 %v500
      %v572 = vpack.c.b16 %v541, %v540
      %v573 = vpack.c.b16 %v543, %v542
      %v574 = vpack.c.b16 %v545, %v544
      %v575 = vpack.c.b16 %v547, %v546
      %v576 = vpack.c.b16 %v549, %v548
      %v577 = vpack.c.b16 %v551, %v550
      %v578 = vpack.c.b16 %v553, %v552
      %v579 = vpack.c.b16 %v555, %v554
      %v580 = vpack.c.b16 %v557, %v556
      %v581 = vpack.c.b16 %v559, %v558
      %v582 = vpack.c.b16 %v561, %v560
      %v583 = vpack.c.b16 %v563, %v562
      %v584 = vpack.c.b16 %v565, %v564
      %v585 = vpack.c.b16 %v567, %v566
      %v586 = vpack.c.b16 %v569, %v568
      %v587 = vpack.c.b16 %v571, %v570
      %604 = vmatprep.subr.bf16.mxu0 0
      %605 = vmatpush1.bf16.msra.mxu0 %v579
      %606 = vmatprep.subr.bf16.mxu0 0
      %607 = vmatpush1.bf16.msra.mxu0 %v578
      %608 = vmatprep.subr.bf16.mxu0 0
      %609 = vmatpush1.bf16.msra.mxu0 %v577
      %610 = vmatprep.subr.bf16.mxu0 0
      %611 = vmatpush1.bf16.msra.mxu0 %v576
      %612 = vmatprep.subr.bf16.mxu0 0
      %613 = vmatpush1.bf16.msra.mxu0 %v575
      %614 = vmatprep.subr.bf16.mxu0 0
      %615 = vmatpush1.bf16.msra.mxu0 %v574
      %616 = vmatprep.subr.bf16.mxu0 0
      %617 = vmatpush1.bf16.msra.mxu0 %v573
      %618 = vmatprep.subr.bf16.mxu0 0
      %619 = vmatpush1.bf16.msra.mxu0 %v572
      %620 = vmatprep.subr.bf16.mxu0 0
      %621 = vmatpush2.bf16.msra.mxu0 %v587
      %622 = vmatprep.subr.bf16.mxu0 0
      %623 = vmatpush2.bf16.msra.mxu0 %v586
      %624 = vmatprep.subr.bf16.mxu0 0
      %625 = vmatpush2.bf16.msra.mxu0 %v585
      %626 = vmatprep.subr.bf16.mxu0 0
      %627 = vmatpush2.bf16.msra.mxu0 %v584
      %628 = vmatprep.subr.bf16.mxu0 0
      %629 = vmatpush2.bf16.msra.mxu0 %v583
      %630 = vmatprep.subr.bf16.mxu0 0
      %631 = vmatpush2.bf16.msra.mxu0 %v582
      %632 = vmatprep.subr.bf16.mxu0 0
      %633 = vmatpush2.bf16.msra.mxu0 %v581
      %634 = vmatprep.subr.bf16.mxu0 0
      %635 = vmatpush2.bf16.msra.mxu0 %v580
      %636 = vmatprep.mubr.bf16.mxu0 %v454
      %637 = vmatmul.mubr.bf16.gmra.mxu0 %v453
      %v638 = vpop.f32.mrf.mxu0
      %v639 = vadd.f32 %v506, %v638
      %v640 = vpop.f32.mrf.mxu0
      %v641 = vpop.f32.mrf.mxu0
      %v642 = vadd.f32 %v506, %v641
      %v643 = vpop.f32.mrf.mxu0
      %644 = vmatprep.mubr.bf16.mxu0 %v456
      %645 = vmatmul.mubr.bf16.gmra.mxu0 %v455
      %v646 = vpop.f32.mrf.mxu0
      %v647 = vadd.f32 %v506, %v646
      %v648 = vpop.f32.mrf.mxu0
      %v649 = vpop.f32.mrf.mxu0
      %v650 = vadd.f32 %v506, %v649
      %v651 = vpop.f32.mrf.mxu0
      %652 = vmatprep.mubr.bf16.mxu0 %v458
      %653 = vmatmul.mubr.bf16.gmra.mxu0 %v457
      %v654 = vpop.f32.mrf.mxu0
      %v655 = vadd.f32 %v506, %v654
      %v656 = vpop.f32.mrf.mxu0
      %v657 = vpop.f32.mrf.mxu0
      %v658 = vadd.f32 %v506, %v657
      %v659 = vpop.f32.mrf.mxu0
      %660 = vmatprep.mubr.bf16.mxu0 %v460
      %661 = vmatmul.mubr.bf16.gmra.mxu0 %v459
      %v662 = vpop.f32.mrf.mxu0
      %v663 = vadd.f32 %v506, %v662
      %v664 = vpop.f32.mrf.mxu0
      %v665 = vpop.f32.mrf.mxu0
      %v666 = vadd.f32 %v506, %v665
      %v667 = vpop.f32.mrf.mxu0
      %668 = vmatprep.mubr.bf16.mxu0 %v462
      %669 = vmatmul.mubr.bf16.gmra.mxu0 %v461
      %v670 = vpop.f32.mrf.mxu0
      %v671 = vadd.f32 %v506, %v670
      %v672 = vpop.f32.mrf.mxu0
      %v673 = vpop.f32.mrf.mxu0
      %v674 = vadd.f32 %v506, %v673
      %v675 = vpop.f32.mrf.mxu0
      %676 = vmatprep.mubr.bf16.mxu0 %v464
      %677 = vmatmul.mubr.bf16.gmra.mxu0 %v463
      %v678 = vpop.f32.mrf.mxu0
      %v679 = vadd.f32 %v506, %v678
      %v680 = vpop.f32.mrf.mxu0
      %v681 = vpop.f32.mrf.mxu0
      %v682 = vadd.f32 %v506, %v681
      %v683 = vpop.f32.mrf.mxu0
      %684 = vmatprep.mubr.bf16.mxu0 %v466
      %685 = vmatmul.mubr.bf16.gmra.mxu0 %v465
      %v686 = vpop.f32.mrf.mxu0
      %v687 = vadd.f32 %v506, %v686
      %v688 = vpop.f32.mrf.mxu0
      %v689 = vpop.f32.mrf.mxu0
      %v690 = vadd.f32 %v506, %v689
      %v691 = vpop.f32.mrf.mxu0
      %692 = vmatprep.mubr.bf16.mxu0 %v468
      %693 = vmatmul.mubr.bf16.gmra.mxu0 %v467
      %v694 = vpop.f32.mrf.mxu0
      %v695 = vadd.f32 %v506, %v694
      %v696 = vpop.f32.mrf.mxu0
      %v697 = vpop.f32.mrf.mxu0
      %v698 = vadd.f32 %v506, %v697
      %v699 = vpop.f32.mrf.mxu0
      %700 = vdwg.mxu0
      %v701 = vmax.f32 %v639, 0.0
      %v702 = vmax.f32 %v642, 0.0
      %v703 = vmax.f32 %v647, 0.0
      %v704 = vmax.f32 %v650, 0.0
      %v705 = vmax.f32 %v655, 0.0
      %v706 = vmax.f32 %v658, 0.0
      %v707 = vmax.f32 %v663, 0.0
      %v708 = vmax.f32 %v666, 0.0
      %v709 = vmax.f32 %v671, 0.0
      %v710 = vmax.f32 %v674, 0.0
      %v711 = vmax.f32 %v679, 0.0
      %v712 = vmax.f32 %v682, 0.0
      %v713 = vmax.f32 %v687, 0.0
      %v714 = vmax.f32 %v690, 0.0
      %v715 = vmax.f32 %v695, 0.0
      %v716 = vmax.f32 %v698, 0.0
      %v717 = vpack.c.bf16 %v702, %v701
      %v718 = vpack.c.bf16 %v704, %v703
      %v719 = vpack.c.bf16 %v706, %v705
      %v720 = vpack.c.bf16 %v708, %v707
      %v721 = vpack.c.bf16 %v710, %v709
      %v722 = vpack.c.bf16 %v712, %v711
      %v723 = vpack.c.bf16 %v714, %v713
      %v724 = vpack.c.bf16 %v716, %v715
      %v733 = vunpack.c.l.b16 %v717
      %v734 = vunpack.c.h.b16 %v717
      %v735 = vunpack.c.l.b16 %v718
      %v736 = vunpack.c.h.b16 %v718
      %v737 = vunpack.c.l.b16 %v719
      %v738 = vunpack.c.h.b16 %v719
      %v739 = vunpack.c.l.b16 %v720
      %v740 = vunpack.c.h.b16 %v720
      %v741 = vunpack.c.l.b16 %v721
      %v742 = vunpack.c.h.b16 %v721
      %v743 = vunpack.c.l.b16 %v722
      %v744 = vunpack.c.h.b16 %v722
      %v745 = vunpack.c.l.b16 %v723
      %v746 = vunpack.c.h.b16 %v723
      %v747 = vunpack.c.l.b16 %v724
      %v748 = vunpack.c.h.b16 %v724
      %v749 = vpack.c.b16 %v733, %v733
      %v750 = vpack.c.b16 %v734, %v734
      %v751 = vpack.c.b16 %v735, %v735
      %v752 = vpack.c.b16 %v736, %v736
      %v753 = vpack.c.b16 %v737, %v737
      %v754 = vpack.c.b16 %v738, %v738
      %v755 = vpack.c.b16 %v739, %v739
      %v756 = vpack.c.b16 %v740, %v740
      %v757 = vpack.c.b16 %v741, %v741
      %v758 = vpack.c.b16 %v742, %v742
      %v759 = vpack.c.b16 %v743, %v743
      %v760 = vpack.c.b16 %v744, %v744
      %v761 = vpack.c.b16 %v745, %v745
      %v762 = vpack.c.b16 %v746, %v746
      %v763 = vpack.c.b16 %v747, %v747
      %v764 = vpack.c.b16 %v748, %v748
      %781 = vst [vmem:[#allocation11] sm:$0xf] %v749
      %782 = vst [vmem:[#allocation11 + $0x4] sm:$0xf] %v750
      %783 = vst [vmem:[#allocation11 + $0x8] sm:$0xf] %v751
      %784 = vst [vmem:[#allocation11 + $0xc] sm:$0xf] %v752
      %785 = vst [vmem:[#allocation11 + $0x10] sm:$0xf] %v753
      %786 = vst [vmem:[#allocation11 + $0x14] sm:$0xf] %v754
      %787 = vst [vmem:[#allocation11 + $0x18] sm:$0xf] %v755
      %788 = vst [vmem:[#allocation11 + $0x1c] sm:$0xf] %v756
      %789 = vst [vmem:[#allocation11 + $0x20] sm:$0xf] %v757
      %790 = vst [vmem:[#allocation11 + $0x24] sm:$0xf] %v758
      %791 = vst [vmem:[#allocation11 + $0x28] sm:$0xf] %v759
      %792 = vst [vmem:[#allocation11 + $0x2c] sm:$0xf] %v760
      %793 = vst [vmem:[#allocation11 + $0x30] sm:$0xf] %v761
      %794 = vst [vmem:[#allocation11 + $0x34] sm:$0xf] %v762
      %795 = vst [vmem:[#allocation11 + $0x38] sm:$0xf] %v763
      %796 = vst [vmem:[#allocation11 + $0x3c] sm:$0xf] %v764
    $region45: #{tpu_custom_call.1} parent=1 // pred_fallthru
      _
    // Predicated region
    $region46: #{tpu_custom_call.1} parent=1 // pred_check
      _
    $region47: #{tpu_custom_call.1} parent=1 // pred_check_branch
      %798 = sbr.rel (0) target = $region49
    $region48: #{tpu_custom_call.1} parent=1 // pred_region
      %s800 = ssub.s32 1024, 1024
      %801 = vsyncadd [#allocation5], %s800
      %s802 = sshll.u32 [#allocation11], 4
      %s803 = int_to_ptr.vmem [resolvable:$true] %s802
      %808 = dma.vmem_to_hbm [thread:$0]  %s803, 1024, %s5, [#allocation5], 64, 64, 4
    $region49: #{tpu_custom_call.1} parent=1 // pred_fallthru
      _
    // Predicated region
    $region50: #{tpu_custom_call.1} parent=1 // pred_check
      _
    $region51: #{tpu_custom_call.1} parent=1 // pred_check_branch
      %810 = sbr.rel (0) target = $region53
    $region52: #{tpu_custom_call.1} parent=1 // pred_region
      %811 = dma.done [#allocation5], 1024
    $region53: #{tpu_custom_call.1} parent=1 // pred_fallthru
      _
    %812 = vsyncpa [#allocation4], 1
    %813 = vsyncpa [#allocation7], 1
    %814 = vsyncpa [#allocation10], 1
    %815 = vsyncpa [#allocation5], 1

</llo_original>
